<compile_context>
chip_gen: v7x
topology: tpu7x:2x2x1
jax: 0.10.0
libtpu: 0.0.40
codegen_flags: <defaults>
</compile_context>

<pallas_src>
import math

import jax
import jax.numpy as jnp
import numpy as np
from jax.experimental import pallas as pl
from jax.experimental.pallas import tpu as pltpu


# ----------------------------- Pallas kernels ------------------------------

def _row_tile(n, max_tile=256):
    # Full array if small (block == full dim is always legal), else a multiple of 8.
    return n if n <= max_tile else max_tile


def _qkv_proj_kernel(xk_ref, xv_ref, xq_ref, wk_ref, wv_ref, wq_ref, b_ref,
                     ko_ref, vo_ref, qo_ref):
    # x*: [TM, Din]; w*: [Din, Dout] (pre-transposed); b: [3, Dout] (rows = k, v, q-scaled)
    b = b_ref[...]
    ko_ref[...] = jnp.dot(xk_ref[...], wk_ref[...],
                          preferred_element_type=jnp.float32) + b[0:1, :]
    vo_ref[...] = jnp.dot(xv_ref[...], wv_ref[...],
                          preferred_element_type=jnp.float32) + b[1:2, :]
    qo_ref[...] = jnp.dot(xq_ref[...], wq_ref[...],
                          preferred_element_type=jnp.float32) + b[2:3, :]


def pallas_fused_qkv(xk, xv, xq, wk_t, wv_t, wq_t, b3):
    """Fused K/V/Q projections. xk/xv/xq: [N, Din] (same N); w*_t: [Din, Dout]; b3: [3, Dout]."""
    N, Din = xk.shape
    Dout = wk_t.shape[1]
    TM = _row_tile(N)
    grid = (pl.cdiv(N, TM),)
    x_spec = pl.BlockSpec((TM, Din), lambda i: (i, 0))
    w_spec = pl.BlockSpec((Din, Dout), lambda i: (0, 0))   # resident across row tiles
    o_spec = pl.BlockSpec((TM, Dout), lambda i: (i, 0))
    return pl.pallas_call(
        _qkv_proj_kernel,
        out_shape=(jax.ShapeDtypeStruct((N, Dout), jnp.float32),
                   jax.ShapeDtypeStruct((N, Dout), jnp.float32),
                   jax.ShapeDtypeStruct((N, Dout), jnp.float32)),
        grid=grid,
        in_specs=[x_spec, x_spec, x_spec, w_spec, w_spec, w_spec,
                  pl.BlockSpec((3, Dout), lambda i: (0, 0))],
        out_specs=(o_spec, o_spec, o_spec),
        compiler_params=pltpu.CompilerParams(dimension_semantics=("parallel",)),
    )(xk, xv, xq, wk_t, wv_t, wq_t, b3)


def _linear_kernel(x_ref, w_ref, b_ref, o_ref):
    o_ref[...] = jnp.dot(x_ref[...], w_ref[...],
                         preferred_element_type=jnp.float32) + b_ref[...]


def pallas_linear(x2d, w_t, b):
    """Row-tiled y = x2d @ w_t + b (fallback path when Sq != Sk)."""
    N, Din = x2d.shape
    Dout = w_t.shape[1]
    TM = _row_tile(N)
    return pl.pallas_call(
        _linear_kernel,
        out_shape=jax.ShapeDtypeStruct((N, Dout), jnp.float32),
        grid=(pl.cdiv(N, TM),),
        in_specs=[pl.BlockSpec((TM, Din), lambda i: (i, 0)),
                  pl.BlockSpec((Din, Dout), lambda i: (0, 0)),
                  pl.BlockSpec((1, Dout), lambda i: (0, 0))],
        out_specs=pl.BlockSpec((TM, Dout), lambda i: (i, 0)),
        compiler_params=pltpu.CompilerParams(dimension_semantics=("parallel",)),
    )(x2d, w_t, b.reshape(1, Dout))


def _attn_out_kernel(q_ref, k_ref, v_ref, wo_ref, bo_ref, out_ref, attn0_ref):
    # One batch element per grid step; all heads processed together.
    q = q_ref[0]                                   # [H, Sq, dh]  (already pre-scaled)
    k = k_ref[0]                                   # [H, Sk, dh]
    v = v_ref[0]                                   # [H, Sk, dh]
    scores = jnp.einsum("hqd,hkd->hqk", q, k,
                        preferred_element_type=jnp.float32)          # [H, Sq, Sk]
    scores = scores - jnp.max(scores, axis=-1, keepdims=True)
    e = jnp.exp(scores)
    # approx=True would move the divide to the EUP, but loosens the 1e-5-ish tolerance.
    attn = e * pl.reciprocal(jnp.sum(e, axis=-1, keepdims=True), approx=False)
    attn0_ref[0] = attn[0]                         # only head 0 is ever used downstream
    ctx = jnp.einsum("hqk,hkd->hqd", attn, v,
                     preferred_element_type=jnp.float32)             # [H, Sq, dh]
    # Fused final linear: output = sum_h ctx_h @ Wo^T[h*dh:(h+1)*dh, :] + bo
    proj = jnp.einsum("hqd,hdo->hqo", ctx, wo_ref[...],
                      preferred_element_type=jnp.float32)            # [H, Sq, D]
    out_ref[0] = jnp.sum(proj, axis=0) + bo_ref[...]


def pallas_attention_fused_output(q_up, k_up, v_up, wo_heads, bo):
    """q_up/k_up/v_up: [B, H, S, dh]; wo_heads: [H, dh, D]; bo: [D].
       Returns (output [B, Sq, D], top_attn [B, Sq, Sk])."""
    B, H, Sq, dh = q_up.shape
    Sk = k_up.shape[2]
    D = H * dh
    return pl.pallas_call(
        _attn_out_kernel,
        out_shape=(jax.ShapeDtypeStruct((B, Sq, D), jnp.float32),
                   jax.ShapeDtypeStruct((B, Sq, Sk), jnp.float32)),
        grid=(B,),
        in_specs=[
            pl.BlockSpec((1, H, Sq, dh), lambda b: (b, 0, 0, 0)),
            pl.BlockSpec((1, H, Sk, dh), lambda b: (b, 0, 0, 0)),
            pl.BlockSpec((1, H, Sk, dh), lambda b: (b, 0, 0, 0)),
            pl.BlockSpec((H, dh, D), lambda b: (0, 0, 0)),   # resident
            pl.BlockSpec((1, D), lambda b: (0, 0)),          # resident
        ],
        out_specs=(
            pl.BlockSpec((1, Sq, D), lambda b: (b, 0, 0)),
            pl.BlockSpec((1, Sq, Sk), lambda b: (b, 0, 0)),
        ),
        compiler_params=pltpu.CompilerParams(dimension_semantics=("parallel",)),
    )(q_up, k_up, v_up, wo_heads, bo.reshape(1, D))


# ----------------------------- Module wrapper -------------------------------

class MultiHeadedAttentionPallas:
    def __init__(self, head_count, model_dim, dropout=0.1, *, key):
        assert model_dim % head_count == 0
        self.head_count = head_count
        self.model_dim = model_dim
        self.dim_per_head = model_dim // head_count
        ks = jax.random.split(key, 8)
        bound = 1.0 / math.sqrt(model_dim)

        def init_linear(kw, kb):
            w = jax.random.uniform(kw, (model_dim, model_dim), jnp.float32, -bound, bound)
            b = jax.random.uniform(kb, (model_dim,), jnp.float32, -bound, bound)
            return w, b  # w stored as [out, in] like nn.Linear

        self.Wk, self.bk = init_linear(ks[0], ks[1])
        self.Wv, self.bv = init_linear(ks[2], ks[3])
        self.Wq, self.bq = init_linear(ks[4], ks[5])
        self.Wo, self.bo = init_linear(ks[6], ks[7])

        # Precomputed kernel-side parameters.
        scale = 1.0 / math.sqrt(self.dim_per_head)
        self._WkT = self.Wk.T
        self._WvT = self.Wv.T
        self._WqT_scaled = self.Wq.T * scale        # fold 1/sqrt(dh) into the projection
        self._bq_scaled = self.bq * scale
        self._b3 = jnp.stack([self.bk, self.bv, self._bq_scaled])          # [3, D]
        self._Wo_heads = self.Wo.T.reshape(head_count, self.dim_per_head, model_dim)

    def _split_heads(self, x, B):
        # [B, S, D] -> [B, H, S, dh]
        return x.reshape(B, -1, self.head_count, self.dim_per_head).transpose(0, 2, 1, 3)

    def __call__(self, key_t, value_t, query_t):
        B, Sk, D = key_t.shape
        Sq = query_t.shape[1]

        if Sq == Sk:
            # Common path: one fused pallas_call for the three projections.
            k_proj, v_proj, q_proj = pallas_fused_qkv(
                key_t.reshape(B * Sk, D), value_t.reshape(B * Sk, D),
                query_t.reshape(B * Sq, D),
                self._WkT, self._WvT, self._WqT_scaled, self._b3)
        else:
            k_proj = pallas_linear(key_t.reshape(B * Sk, D), self._WkT, self.bk)
            v_proj = pallas_linear(value_t.reshape(B * Sk, D), self._WvT, self.bv)
            q_proj = pallas_linear(query_t.reshape(B * Sq, D), self._WqT_scaled,
                                   self._bq_scaled)

        key_up = self._split_heads(k_proj.reshape(B, Sk, D), B)      # returned (module contract)
        value_up = self._split_heads(v_proj.reshape(B, Sk, D), B)    # returned (module contract)
        query_up = self._split_heads(q_proj.reshape(B, Sq, D), B)    # pre-scaled

        # Attention + final linear fused; context never hits HBM, only head-0 attn written.
        output, top_attn = pallas_attention_fused_output(
            query_up, key_up, value_up, self._Wo_heads, self.bo)

        return output, top_attn, [key_up, value_up]


# ----------------------------- Reference (pure JAX) -------------------------

def reference_forward(mha, key_t, value_t, query_t):
    B, Sk, D = key_t.shape

    def lin(x, w, b):
        return x @ w.T + b

    k_up = mha._split_heads(lin(key_t, mha.Wk, mha.bk), B)
    v_up = mha._split_heads(lin(value_t, mha.Wv, mha.bv), B)
    q_up = mha._split_heads(lin(query_t, mha.Wq, mha.bq), B) / math.sqrt(mha.dim_per_head)
    scores = jnp.einsum("bhqd,bhkd->bhqk", q_up, k_up)
    attn = jax.nn.softmax(scores, axis=-1)
    ctx = jnp.einsum("bhqk,bhkd->bhqd", attn, v_up)
    ctx = ctx.transpose(0, 2, 1, 3).reshape(B, -1, D)
    out = lin(ctx, mha.Wo, mha.bo)
    return out, attn[:, 0], [k_up, v_up]


# --------------------------------- Main --------------------------------------

if __name__ == "__main__":
    rng = jax.random.PRNGKey(0)
    k_params, k_k, k_v, k_q = jax.random.split(rng, 4)

    batch, seq, model_dim, heads = 2, 8, 32, 4
    mha = MultiHeadedAttentionPallas(heads, model_dim, dropout=0.1, key=k_params)

    key_t = jax.random.normal(k_k, (batch, seq, model_dim), jnp.float32)
    value_t = jax.random.normal(k_v, (batch, seq, model_dim), jnp.float32)
    query_t = jax.random.normal(k_q, (batch, seq, model_dim), jnp.float32)

    out, top_attn, (key_up, value_up) = mha(key_t, value_t, query_t)
    jax.block_until_ready(out)
    jax.block_until_ready(top_attn)

    ref_out, ref_attn, (ref_k, ref_v) = reference_forward(mha, key_t, value_t, query_t)

    assert out.shape == (batch, seq, model_dim)
    assert top_attn.shape == (batch, seq, seq)
    np.testing.assert_allclose(np.asarray(out), np.asarray(ref_out), rtol=1e-4, atol=1e-5)
    np.testing.assert_allclose(np.asarray(top_attn), np.asarray(ref_attn), rtol=1e-4, atol=1e-5)
    np.testing.assert_allclose(np.asarray(key_up), np.asarray(ref_k), rtol=1e-4, atol=1e-5)
    np.testing.assert_allclose(np.asarray(value_up), np.asarray(ref_v), rtol=1e-4, atol=1e-5)

    print("KERNEL_OK")
</pallas_src>

<mosaic_0001>
module attributes {stable_mosaic.version = 11 : i64} {
  func.func @_qkv_proj_kernel(%arg0: i32, %arg1: memref<16x32xf32, #tpu.memory_space<vmem>>, %arg2: memref<16x32xf32, #tpu.memory_space<vmem>>, %arg3: memref<16x32xf32, #tpu.memory_space<vmem>>, %arg4: memref<32x32xf32, #tpu.memory_space<vmem>>, %arg5: memref<32x32xf32, #tpu.memory_space<vmem>>, %arg6: memref<32x32xf32, #tpu.memory_space<vmem>>, %arg7: memref<3x32xf32, #tpu.memory_space<vmem>>, %arg8: memref<16x32xf32, #tpu.memory_space<vmem>>, %arg9: memref<16x32xf32, #tpu.memory_space<vmem>>, %arg10: memref<16x32xf32, #tpu.memory_space<vmem>>) attributes {dimension_semantics = [#tpu.dimension_semantics<parallel>], iteration_bounds = array<i64: 1>, scalar_prefetch = 0 : i64, scratch_operands = 0 : i64, tpu.core_type = #tpu.core_type<tc>, window_params = [{transform_indices = @transform_0, window_bounds = array<i64: 16, 32>}, {transform_indices = @transform_1, window_bounds = array<i64: 16, 32>}, {transform_indices = @transform_2, window_bounds = array<i64: 16, 32>}, {pipeline_mode = #tpu.pipeline_mode<synchronous>, transform_indices = @transform_3, window_bounds = array<i64: 32, 32>}, {pipeline_mode = #tpu.pipeline_mode<synchronous>, transform_indices = @transform_4, window_bounds = array<i64: 32, 32>}, {pipeline_mode = #tpu.pipeline_mode<synchronous>, transform_indices = @transform_5, window_bounds = array<i64: 32, 32>}, {pipeline_mode = #tpu.pipeline_mode<synchronous>, transform_indices = @transform_6, window_bounds = array<i64: 3, 32>}, {transform_indices = @transform_7, window_bounds = array<i64: 16, 32>}, {transform_indices = @transform_8, window_bounds = array<i64: 16, 32>}, {transform_indices = @transform_9, window_bounds = array<i64: 16, 32>}]} {
    %c0 = arith.constant 0 : index
    %c0_0 = arith.constant 0 : index
    %0 = vector.load %arg7[%c0, %c0_0] : memref<3x32xf32, #tpu.memory_space<vmem>>, vector<3x32xf32>
    %c0_1 = arith.constant 0 : index
    %c0_2 = arith.constant 0 : index
    %1 = vector.load %arg1[%c0_1, %c0_2] : memref<16x32xf32, #tpu.memory_space<vmem>>, vector<16x32xf32>
    %c0_3 = arith.constant 0 : index
    %c0_4 = arith.constant 0 : index
    %2 = vector.load %arg4[%c0_3, %c0_4] : memref<32x32xf32, #tpu.memory_space<vmem>>, vector<32x32xf32>
    %cst = arith.constant dense<0.000000e+00> : vector<16x32xf32>
    %3 = tpu.matmul %1, %2, %cst {dimension_numbers = #tpu.dot_dimension_numbers<[1], [0], [0], [1], [0, 0, 1, 1], [], []>} : vector<16x32xf32>, vector<32x32xf32>, vector<16x32xf32> -> vector<16x32xf32>
    %4 = vector.extract_strided_slice %0 {offsets = [0, 0], sizes = [1, 32], strides = [1, 1]} : vector<3x32xf32> to vector<1x32xf32>
    %5 = vector.broadcast %4 : vector<1x32xf32> to vector<16x32xf32>
    %6 = arith.addf %3, %5 : vector<16x32xf32>
    %c0_5 = arith.constant 0 : index
    %c0_6 = arith.constant 0 : index
    %7 = vector.load %arg8[%c0_5, %c0_6] : memref<16x32xf32, #tpu.memory_space<vmem>>, vector<16x32xf32>
    tpu.vector_store %arg8[%c0_5, %c0_6], %6 {strides = array<i32>} : memref<16x32xf32, #tpu.memory_space<vmem>>, vector<16x32xf32>,
    %c0_7 = arith.constant 0 : index
    %c0_8 = arith.constant 0 : index
    %8 = vector.load %arg2[%c0_7, %c0_8] : memref<16x32xf32, #tpu.memory_space<vmem>>, vector<16x32xf32>
    %c0_9 = arith.constant 0 : index
    %c0_10 = arith.constant 0 : index
    %9 = vector.load %arg5[%c0_9, %c0_10] : memref<32x32xf32, #tpu.memory_space<vmem>>, vector<32x32xf32>
    %cst_11 = arith.constant dense<0.000000e+00> : vector<16x32xf32>
    %10 = tpu.matmul %8, %9, %cst_11 {dimension_numbers = #tpu.dot_dimension_numbers<[1], [0], [0], [1], [0, 0, 1, 1], [], []>} : vector<16x32xf32>, vector<32x32xf32>, vector<16x32xf32> -> vector<16x32xf32>
    %11 = vector.extract_strided_slice %0 {offsets = [1, 0], sizes = [1, 32], strides = [1, 1]} : vector<3x32xf32> to vector<1x32xf32>
    %12 = vector.broadcast %11 : vector<1x32xf32> to vector<16x32xf32>
    %13 = arith.addf %10, %12 : vector<16x32xf32>
    %c0_12 = arith.constant 0 : index
    %c0_13 = arith.constant 0 : index
    %14 = vector.load %arg9[%c0_12, %c0_13] : memref<16x32xf32, #tpu.memory_space<vmem>>, vector<16x32xf32>
    tpu.vector_store %arg9[%c0_12, %c0_13], %13 {strides = array<i32>} : memref<16x32xf32, #tpu.memory_space<vmem>>, vector<16x32xf32>,
    %c0_14 = arith.constant 0 : index
    %c0_15 = arith.constant 0 : index
    %15 = vector.load %arg3[%c0_14, %c0_15] : memref<16x32xf32, #tpu.memory_space<vmem>>, vector<16x32xf32>
    %c0_16 = arith.constant 0 : index
    %c0_17 = arith.constant 0 : index
    %16 = vector.load %arg6[%c0_16, %c0_17] : memref<32x32xf32, #tpu.memory_space<vmem>>, vector<32x32xf32>
    %cst_18 = arith.constant dense<0.000000e+00> : vector<16x32xf32>
    %17 = tpu.matmul %15, %16, %cst_18 {dimension_numbers = #tpu.dot_dimension_numbers<[1], [0], [0], [1], [0, 0, 1, 1], [], []>} : vector<16x32xf32>, vector<32x32xf32>, vector<16x32xf32> -> vector<16x32xf32>
    %18 = vector.extract_strided_slice %0 {offsets = [2, 0], sizes = [1, 32], strides = [1, 1]} : vector<3x32xf32> to vector<1x32xf32>
    %19 = vector.broadcast %18 : vector<1x32xf32> to vector<16x32xf32>
    %20 = arith.addf %17, %19 : vector<16x32xf32>
    %c0_19 = arith.constant 0 : index
    %c0_20 = arith.constant 0 : index
    %21 = vector.load %arg10[%c0_19, %c0_20] : memref<16x32xf32, #tpu.memory_space<vmem>>, vector<16x32xf32>
    tpu.vector_store %arg10[%c0_19, %c0_20], %20 {strides = array<i32>} : memref<16x32xf32, #tpu.memory_space<vmem>>, vector<16x32xf32>,
    return
  }
  func.func @transform_0(%arg0: i32) -> (i32, i32) {
    %c0_i32 = arith.constant 0 : i32
    %c0_i32_0 = arith.constant 0 : i32
    return %arg0, %c0_i32 : i32, i32
  }
  func.func @transform_1(%arg0: i32) -> (i32, i32) {
    %c0_i32 = arith.constant 0 : i32
    %c0_i32_0 = arith.constant 0 : i32
    return %arg0, %c0_i32 : i32, i32
  }
  func.func @transform_2(%arg0: i32) -> (i32, i32) {
    %c0_i32 = arith.constant 0 : i32
    %c0_i32_0 = arith.constant 0 : i32
    return %arg0, %c0_i32 : i32, i32
  }
  func.func @transform_3(%arg0: i32) -> (i32, i32) {
    %c0_i32 = arith.constant 0 : i32
    %c0_i32_0 = arith.constant 0 : i32
    %c0_i32_1 = arith.constant 0 : i32
    return %c0_i32, %c0_i32_0 : i32, i32
  }
  func.func @transform_4(%arg0: i32) -> (i32, i32) {
    %c0_i32 = arith.constant 0 : i32
    %c0_i32_0 = arith.constant 0 : i32
    %c0_i32_1 = arith.constant 0 : i32
    return %c0_i32, %c0_i32_0 : i32, i32
  }
  func.func @transform_5(%arg0: i32) -> (i32, i32) {
    %c0_i32 = arith.constant 0 : i32
    %c0_i32_0 = arith.constant 0 : i32
    %c0_i32_1 = arith.constant 0 : i32
    return %c0_i32, %c0_i32_0 : i32, i32
  }
  func.func @transform_6(%arg0: i32) -> (i32, i32) {
    %c0_i32 = arith.constant 0 : i32
    %c0_i32_0 = arith.constant 0 : i32
    %c0_i32_1 = arith.constant 0 : i32
    return %c0_i32, %c0_i32_0 : i32, i32
  }
  func.func @transform_7(%arg0: i32) -> (i32, i32) {
    %c0_i32 = arith.constant 0 : i32
    %c0_i32_0 = arith.constant 0 : i32
    return %arg0, %c0_i32 : i32, i32
  }
  func.func @transform_8(%arg0: i32) -> (i32, i32) {
    %c0_i32 = arith.constant 0 : i32
    %c0_i32_0 = arith.constant 0 : i32
    return %arg0, %c0_i32 : i32, i32
  }
  func.func @transform_9(%arg0: i32) -> (i32, i32) {
    %c0_i32 = arith.constant 0 : i32
    %c0_i32_0 = arith.constant 0 : i32
    return %arg0, %c0_i32 : i32, i32
  }
}

</mosaic_0001>

<llo_original>
// kernel: tpu_custom_call.1
$region0: #{tpu_custom_call.1}
  #allocation0 [shape = 'u32[]', space=smem, size = 0x4, offset = 0x4, fixed_abs, tag = 'smem constant byte address 0x4 - core index']
  #allocation1 [shape = 'u32[144,128]{1,0:T(1,128)}', space=vmem, size = 0x12000, scoped, tag = 'internal scratch']
  %s0 = inlined_call_operand.hbm [shape: f32[16,32], index: 0, kind: input, shape index: {}]
  %s1 = inlined_call_operand.hbm [shape: f32[16,32], index: 1, kind: input, shape index: {}]
  %s2 = inlined_call_operand.hbm [shape: f32[16,32], index: 2, kind: input, shape index: {}]
  %s3 = inlined_call_operand.hbm [shape: f32[32,32], index: 3, kind: input, shape index: {}]
  %s4 = inlined_call_operand.hbm [shape: f32[32,32], index: 4, kind: input, shape index: {}]
  %s5 = inlined_call_operand.hbm [shape: f32[32,32], index: 5, kind: input, shape index: {}]
  %s6 = inlined_call_operand.vmem [shape: f32[3,32], index: 6, kind: input, shape index: {}]
  %s7 = inlined_call_operand.hbm [shape: f32[16,32], index: 7, kind: output, shape index: {0}]
  %s8 = inlined_call_operand.hbm [shape: f32[16,32], index: 8, kind: output, shape index: {1}]
  %s9 = inlined_call_operand.hbm [shape: f32[16,32], index: 9, kind: output, shape index: {2}]
  %10 = xla_tuple %s7, %s8, %s9
  %s11 = sld [smem:[#allocation0]]
  $region78: #{tpu_custom_call.1} parent=0
    _
  %s13 = ssub.s32 1, %s11
  %s14 = scalar_select 0, %s13, %s11
  $region1: #{tpu_custom_call.1} parent=0
    #allocation2 [shape = 'u8[8192]{0}', space=vmem, size = 0x2000, scoped, tag = 'input window, operand 0, single buffered']
    #allocation3 [shape = 's32[1]{0}', space=sflag, size = 0x4, scoped, tag = 'scoped memory for tpu_custom_call.1']
    #allocation4 [shape = 's32[1]{0}', space=sflag, size = 0x4, scoped, tag = 'scoped memory for tpu_custom_call.1']
    #allocation5 [shape = 'u8[8192]{0}', space=vmem, size = 0x2000, scoped, tag = 'input window, operand 1, single buffered']
    #allocation6 [shape = 's32[1]{0}', space=sflag, size = 0x4, scoped, tag = 'scoped memory for tpu_custom_call.1']
    #allocation7 [shape = 'u8[8192]{0}', space=vmem, size = 0x2000, scoped, tag = 'input window, operand 2, single buffered']
    #allocation8 [shape = 'u8[16384]{0}', space=vmem, size = 0x4000, scoped, tag = 'input window, operand 3, single buffered']
    #allocation9 [shape = 's32[1]{0}', space=sflag, size = 0x4, scoped, tag = 'scoped memory for tpu_custom_call.1']
    #allocation10 [shape = 'u8[16384]{0}', space=vmem, size = 0x4000, scoped, tag = 'input window, operand 4, single buffered']
    #allocation11 [shape = 'u8[16384]{0}', space=vmem, size = 0x4000, scoped, tag = 'input window, operand 5, single buffered']
    #allocation12 [shape = 's32[1]{0}', space=sflag, size = 0x4, scoped, tag = 'scoped memory for tpu_custom_call.1']
    #allocation13 [shape = 'u8[8192]{0}', space=vmem, size = 0x2000, scoped, tag = 'output window, operand 0, single buffered']
    #allocation14 [shape = 'u8[8192]{0}', space=vmem, size = 0x2000, scoped, tag = 'output window, operand 1, single buffered']
    #allocation15 [shape = 's32[1]{0}', space=sflag, size = 0x4, scoped, tag = 'scoped memory for tpu_custom_call.1']
    #allocation16 [shape = 'u8[8192]{0}', space=vmem, size = 0x2000, scoped, tag = 'output window, operand 2, single buffered']
    %15 = vsyncpa [#allocation3], 0
    %16 = vsyncpa [#allocation6], 0
    %17 = vsyncpa [#allocation9], 0
    %18 = vsyncpa [#allocation12], 0
    %19 = vsyncpa [#allocation4], 0
    %20 = vsyncpa [#allocation15], 0
    // Predicated region
    $region2: #{tpu_custom_call.1} parent=1 // pred_check
      _
    $region3: #{tpu_custom_call.1} parent=1 // pred_check_branch
      %22 = sbr.rel (0) target = $region5
    $region4: #{tpu_custom_call.1} parent=1 // pred_region
      %s24 = ssub.s32 256, 256
      %25 = vsyncadd [#allocation3], %s24
      %s26 = sshll.u32 [#allocation2], 4
      %s27 = int_to_ptr.vmem [resolvable:$true] %s26
      %32 = dma.hbm_to_vmem [thread:$0]  %s0, 256, %s27, [#allocation3], 128, 128, 8
    $region5: #{tpu_custom_call.1} parent=1 // pred_fallthru
      _
    // Predicated region
    $region6: #{tpu_custom_call.1} parent=1 // pred_check
      _
    $region7: #{tpu_custom_call.1} parent=1 // pred_check_branch
      %34 = sbr.rel (0) target = $region9
    $region8: #{tpu_custom_call.1} parent=1 // pred_region
      %s36 = ssub.s32 256, 256
      %37 = vsyncadd [#allocation6], %s36
      %s38 = sshll.u32 [#allocation5], 4
      %s39 = int_to_ptr.vmem [resolvable:$true] %s38
      %44 = dma.hbm_to_vmem [thread:$0]  %s1, 256, %s39, [#allocation6], 128, 128, 8
    $region9: #{tpu_custom_call.1} parent=1 // pred_fallthru
      _
    // Predicated region
    $region10: #{tpu_custom_call.1} parent=1 // pred_check
      _
    $region11: #{tpu_custom_call.1} parent=1 // pred_check_branch
      %46 = sbr.rel (0) target = $region13
    $region12: #{tpu_custom_call.1} parent=1 // pred_region
      %s48 = ssub.s32 256, 256
      %49 = vsyncadd [#allocation6], %s48
      %s50 = sshll.u32 [#allocation7], 4
      %s51 = int_to_ptr.vmem [resolvable:$true] %s50
      %56 = dma.hbm_to_vmem [thread:$0]  %s2, 256, %s51, [#allocation6], 128, 128, 8
    $region13: #{tpu_custom_call.1} parent=1 // pred_fallthru
      _
    // Predicated region
    $region14: #{tpu_custom_call.1} parent=1 // pred_check
      _
    $region15: #{tpu_custom_call.1} parent=1 // pred_check_branch
      %58 = sbr.rel (0) target = $region17
    $region16: #{tpu_custom_call.1} parent=1 // pred_region
      %s60 = ssub.s32 512, 512
      %61 = vsyncadd [#allocation9], %s60
      %s62 = sshll.u32 [#allocation8], 4
      %s63 = int_to_ptr.vmem [resolvable:$true] %s62
      %68 = dma.hbm_to_vmem [thread:$0]  %s3, 512, %s63, [#allocation9], 128, 128, 8
    $region17: #{tpu_custom_call.1} parent=1 // pred_fallthru
      _
    // Predicated region
    $region18: #{tpu_custom_call.1} parent=1 // pred_check
      _
    $region19: #{tpu_custom_call.1} parent=1 // pred_check_branch
      %70 = sbr.rel (0) target = $region21
    $region20: #{tpu_custom_call.1} parent=1 // pred_region
      %s72 = ssub.s32 512, 512
      %73 = vsyncadd [#allocation9], %s72
      %s74 = sshll.u32 [#allocation10], 4
      %s75 = int_to_ptr.vmem [resolvable:$true] %s74
      %80 = dma.hbm_to_vmem [thread:$0]  %s4, 512, %s75, [#allocation9], 128, 128, 8
    $region21: #{tpu_custom_call.1} parent=1 // pred_fallthru
      _
    // Predicated region
    $region22: #{tpu_custom_call.1} parent=1 // pred_check
      _
    $region23: #{tpu_custom_call.1} parent=1 // pred_check_branch
      %82 = sbr.rel (0) target = $region25
    $region24: #{tpu_custom_call.1} parent=1 // pred_region
      %s84 = ssub.s32 512, 512
      %85 = vsyncadd [#allocation12], %s84
      %s86 = sshll.u32 [#allocation11], 4
      %s87 = int_to_ptr.vmem [resolvable:$true] %s86
      %92 = dma.hbm_to_vmem [thread:$0]  %s5, 512, %s87, [#allocation12], 128, 128, 8
    $region25: #{tpu_custom_call.1} parent=1 // pred_fallthru
      _
    // Predicated region
    $region26: #{tpu_custom_call.1} parent=1 // pred_check
      _
    $region27: #{tpu_custom_call.1} parent=1 // pred_check_branch
      %94 = sbr.rel (0) target = $region29
    $region28: #{tpu_custom_call.1} parent=1 // pred_region
      _
    $region29: #{tpu_custom_call.1} parent=1 // pred_fallthru
      _
    // Predicated region
    $region30: #{tpu_custom_call.1} parent=1 // pred_check
      _
    $region31: #{tpu_custom_call.1} parent=1 // pred_check_branch
      %96 = sbr.rel (0) target = $region33
    $region32: #{tpu_custom_call.1} parent=1 // pred_region
      %97 = dma.done [#allocation3], 256
    $region33: #{tpu_custom_call.1} parent=1 // pred_fallthru
      _
    // Predicated region
    $region34: #{tpu_custom_call.1} parent=1 // pred_check
      _
    $region35: #{tpu_custom_call.1} parent=1 // pred_check_branch
      %99 = sbr.rel (0) target = $region37
    $region36: #{tpu_custom_call.1} parent=1 // pred_region
      %100 = dma.done [#allocation6], 256
    $region37: #{tpu_custom_call.1} parent=1 // pred_fallthru
      _
    // Predicated region
    $region38: #{tpu_custom_call.1} parent=1 // pred_check
      _
    $region39: #{tpu_custom_call.1} parent=1 // pred_check_branch
      %102 = sbr.rel (0) target = $region41
    $region40: #{tpu_custom_call.1} parent=1 // pred_region
      %103 = dma.done [#allocation6], 256
    $region41: #{tpu_custom_call.1} parent=1 // pred_fallthru
      _
    // Predicated region
    $region42: #{tpu_custom_call.1} parent=1 // pred_check
      _
    $region43: #{tpu_custom_call.1} parent=1 // pred_check_branch
      %105 = sbr.rel (0) target = $region45
    $region44: #{tpu_custom_call.1} parent=1 // pred_region
      %106 = dma.done [#allocation9], 512
    $region45: #{tpu_custom_call.1} parent=1 // pred_fallthru
      _
    // Predicated region
    $region46: #{tpu_custom_call.1} parent=1 // pred_check
      _
    $region47: #{tpu_custom_call.1} parent=1 // pred_check_branch
      %108 = sbr.rel (0) target = $region49
    $region48: #{tpu_custom_call.1} parent=1 // pred_region
      %109 = dma.done [#allocation9], 512
    $region49: #{tpu_custom_call.1} parent=1 // pred_fallthru
      _
    // Predicated region
    $region50: #{tpu_custom_call.1} parent=1 // pred_check
      _
    $region51: #{tpu_custom_call.1} parent=1 // pred_check_branch
      %111 = sbr.rel (0) target = $region53
    $region52: #{tpu_custom_call.1} parent=1 // pred_region
      %112 = dma.done [#allocation12], 512
    $region53: #{tpu_custom_call.1} parent=1 // pred_fallthru
      _
    %v113 = vld [vmem:[%s6] sm:$0x7]
    %v114 = vld [vmem:[#allocation2] sm:$0xff]
    %v115 = vld [vmem:[#allocation2 + $0x8] sm:$0xff]
    %v116 = vld [vmem:[#allocation8] sm:$0xff]
    %v117 = vld [vmem:[#allocation8 + $0x8] sm:$0xff]
    %v118 = vld [vmem:[#allocation8 + $0x10] sm:$0xff]
    %v119 = vld [vmem:[#allocation8 + $0x18] sm:$0xff]
    %v120 = vlaneseq
    %v121 = vshrl.u32 %v120, 7
    %v122 = vsub.s32 0, %v121
    %v123 = vrot.slane %v113, %v122
    %vm124 = vcmask 261120
    %v126 = vsel %vm124, %v114, 0
    %v129 = vsel %vm124, %v115, 0
    %131 = vmatprep.subr.mxu0 0.0
    %132 = vmatpush1.msra.mxu0 %v116
    %133 = vmatprep.subr.mxu0 0.0
    %134 = vmatpush1.msra.mxu0 %v117
    %135 = vmatprep.subr.mxu0 0.0
    %136 = vmatpush1.msra.mxu0 %v118
    %137 = vmatprep.subr.mxu0 0.0
    %138 = vmatpush1.msra.mxu0 %v119
    %139 = vmatprep.subr.mxu0 0.0
    %140 = vmatpush1.msra.mxu0 0.0
    %141 = vmatprep.subr.mxu0 0.0
    %142 = vmatpush1.msra.mxu0 0.0
    %143 = vmatprep.subr.mxu0 0.0
    %144 = vmatpush1.msra.mxu0 0.0
    %145 = vmatprep.subr.mxu0 0.0
    %146 = vmatpush1.msra.mxu0 0.0
    %147 = vmatprep.subr.mxu0 0.0
    %148 = vmatpush1.msra.mxu0 0.0
    %149 = vmatprep.subr.mxu0 0.0
    %150 = vmatpush1.msra.mxu0 0.0
    %151 = vmatprep.subr.mxu0 0.0
    %152 = vmatpush1.msra.mxu0 0.0
    %153 = vmatprep.subr.mxu0 0.0
    %154 = vmatpush1.msra.mxu0 0.0
    %155 = vmatprep.subr.mxu0 0.0
    %156 = vmatpush1.msra.mxu0 0.0
    %157 = vmatprep.subr.mxu0 0.0
    %158 = vmatpush1.msra.mxu0 0.0
    %159 = vmatprep.subr.mxu0 0.0
    %160 = vmatpush1.msra.mxu0 0.0
    %161 = vmatprep.subr.mxu0 0.0
    %162 = vmatpush1.msra.mxu0 0.0
    %163 = vmatprep.subr.mxu0 0.0
    %164 = vmatpush1.msra.mxu0 0.0
    %165 = vmatprep.subr.mxu0 0.0
    %166 = vmatpush1.msra.mxu0 0.0
    %167 = vmatprep.subr.mxu0 0.0
    %168 = vmatpush1.msra.mxu0 0.0
    %169 = vmatprep.subr.mxu0 0.0
    %170 = vmatpush1.msra.mxu0 0.0
    %171 = vmatprep.subr.mxu0 0.0
    %172 = vmatpush1.msra.mxu0 0.0
    %173 = vmatprep.subr.mxu0 0.0
    %174 = vmatpush1.msra.mxu0 0.0
    %175 = vmatprep.subr.mxu0 0.0
    %176 = vmatpush1.msra.mxu0 0.0
    %177 = vmatprep.subr.mxu0 0.0
    %178 = vmatpush1.msra.mxu0 0.0
    %179 = vmatprep.subr.mxu0 0.0
    %180 = vmatpush1.msra.mxu0 0.0
    %181 = vmatprep.subr.mxu0 0.0
    %182 = vmatpush1.msra.mxu0 0.0
    %183 = vmatprep.subr.mxu0 0.0
    %184 = vmatpush1.msra.mxu0 0.0
    %185 = vmatprep.subr.mxu0 0.0
    %186 = vmatpush1.msra.mxu0 0.0
    %187 = vmatprep.subr.mxu0 0.0
    %188 = vmatpush1.msra.mxu0 0.0
    %189 = vmatprep.subr.mxu0 0.0
    %190 = vmatpush1.msra.mxu0 0.0
    %191 = vmatprep.subr.mxu0 0.0
    %192 = vmatpush1.msra.mxu0 0.0
    %193 = vmatprep.subr.mxu0 0.0
    %194 = vmatpush1.msra.mxu0 0.0
    %195 = vmatprep.mubr.f32.mxu0 0.0
    %196 = vmatmul.mubr.f32.gmra.mrb[0].mxu0 %v126
    %v197 = vpop.f32.mrb[0].mxu0
    %v198 = vadd.f32 %v123, %v197
    %v199 = vpop.f32.mrb[0].mxu0
    %200 = vmatprep.mubr.f32.mxu0 0.0
    %201 = vmatmul.mubr.f32.gmra.mrb[0].mxu0 %v129
    %v202 = vpop.f32.mrb[0].mxu0
    %v203 = vadd.f32 %v123, %v202
    %v204 = vpop.f32.mrb[0].mxu0
    %205 = vdwg.mxu0
    %206 = vst.msk [vmem:[#allocation13] sm:$0xff] %vm124, %v198
    %207 = vst.msk [vmem:[#allocation13 + $0x8] sm:$0xff] %vm124, %v203
    %v208 = vld [vmem:[#allocation5] sm:$0xff]
    %v209 = vld [vmem:[#allocation5 + $0x8] sm:$0xff]
    %v210 = vld [vmem:[#allocation10] sm:$0xff]
    %v211 = vld [vmem:[#allocation10 + $0x8] sm:$0xff]
    %v212 = vld [vmem:[#allocation10 + $0x10] sm:$0xff]
    %v213 = vld [vmem:[#allocation10 + $0x18] sm:$0xff]
    %v214 = vlaneseq
    %v215 = vshrl.u32 %v214, 7
    %v216 = vsub.s32 1, %v215
    %v217 = vrot.slane %v113, %v216
    %v219 = vsel %vm124, %v208, 0
    %v222 = vsel %vm124, %v209, 0
    %224 = vmatprep.subr.mxu0 0.0
    %225 = vmatpush1.msra.mxu0 %v210
    %226 = vmatprep.subr.mxu0 0.0
    %227 = vmatpush1.msra.mxu0 %v211
    %228 = vmatprep.subr.mxu0 0.0
    %229 = vmatpush1.msra.mxu0 %v212
    %230 = vmatprep.subr.mxu0 0.0
    %231 = vmatpush1.msra.mxu0 %v213
    %232 = vmatprep.subr.mxu0 0.0
    %233 = vmatpush1.msra.mxu0 0.0
    %234 = vmatprep.subr.mxu0 0.0
    %235 = vmatpush1.msra.mxu0 0.0
    %236 = vmatprep.subr.mxu0 0.0
    %237 = vmatpush1.msra.mxu0 0.0
    %238 = vmatprep.subr.mxu0 0.0
    %239 = vmatpush1.msra.mxu0 0.0
    %240 = vmatprep.subr.mxu0 0.0
    %241 = vmatpush1.msra.mxu0 0.0
    %242 = vmatprep.subr.mxu0 0.0
    %243 = vmatpush1.msra.mxu0 0.0
    %244 = vmatprep.subr.mxu0 0.0
    %245 = vmatpush1.msra.mxu0 0.0
    %246 = vmatprep.subr.mxu0 0.0
    %247 = vmatpush1.msra.mxu0 0.0
    %248 = vmatprep.subr.mxu0 0.0
    %249 = vmatpush1.msra.mxu0 0.0
    %250 = vmatprep.subr.mxu0 0.0
    %251 = vmatpush1.msra.mxu0 0.0
    %252 = vmatprep.subr.mxu0 0.0
    %253 = vmatpush1.msra.mxu0 0.0
    %254 = vmatprep.subr.mxu0 0.0
    %255 = vmatpush1.msra.mxu0 0.0
    %256 = vmatprep.subr.mxu0 0.0
    %257 = vmatpush1.msra.mxu0 0.0
    %258 = vmatprep.subr.mxu0 0.0
    %259 = vmatpush1.msra.mxu0 0.0
    %260 = vmatprep.subr.mxu0 0.0
    %261 = vmatpush1.msra.mxu0 0.0
    %262 = vmatprep.subr.mxu0 0.0
    %263 = vmatpush1.msra.mxu0 0.0
    %264 = vmatprep.subr.mxu0 0.0
    %265 = vmatpush1.msra.mxu0 0.0
    %266 = vmatprep.subr.mxu0 0.0
    %267 = vmatpush1.msra.mxu0 0.0
    %268 = vmatprep.subr.mxu0 0.0
    %269 = vmatpush1.msra.mxu0 0.0
    %270 = vmatprep.subr.mxu0 0.0
    %271 = vmatpush1.msra.mxu0 0.0
    %272 = vmatprep.subr.mxu0 0.0
    %273 = vmatpush1.msra.mxu0 0.0
    %274 = vmatprep.subr.mxu0 0.0
    %275 = vmatpush1.msra.mxu0 0.0
    %276 = vmatprep.subr.mxu0 0.0
    %277 = vmatpush1.msra.mxu0 0.0
    %278 = vmatprep.subr.mxu0 0.0
    %279 = vmatpush1.msra.mxu0 0.0
    %280 = vmatprep.subr.mxu0 0.0
    %281 = vmatpush1.msra.mxu0 0.0
    %282 = vmatprep.subr.mxu0 0.0
    %283 = vmatpush1.msra.mxu0 0.0
    %284 = vmatprep.subr.mxu0 0.0
    %285 = vmatpush1.msra.mxu0 0.0
    %286 = vmatprep.subr.mxu0 0.0
    %287 = vmatpush1.msra.mxu0 0.0
    %288 = vmatprep.mubr.f32.mxu0 0.0
    %289 = vmatmul.mubr.f32.gmra.mrb[0].mxu0 %v219
    %v290 = vpop.f32.mrb[0].mxu0
    %v291 = vadd.f32 %v217, %v290
    %v292 = vpop.f32.mrb[0].mxu0
    %293 = vmatprep.mubr.f32.mxu0 0.0
    %294 = vmatmul.mubr.f32.gmra.mrb[0].mxu0 %v222
    %v295 = vpop.f32.mrb[0].mxu0
    %v296 = vadd.f32 %v217, %v295
    %v297 = vpop.f32.mrb[0].mxu0
    %298 = vdwg.mxu0
    %299 = vst.msk [vmem:[#allocation14] sm:$0xff] %vm124, %v291
    %300 = vst.msk [vmem:[#allocation14 + $0x8] sm:$0xff] %vm124, %v296
    %v301 = vld [vmem:[#allocation7] sm:$0xff]
    %v302 = vld [vmem:[#allocation7 + $0x8] sm:$0xff]
    %v303 = vld [vmem:[#allocation11] sm:$0xff]
    %v304 = vld [vmem:[#allocation11 + $0x8] sm:$0xff]
    %v305 = vld [vmem:[#allocation11 + $0x10] sm:$0xff]
    %v306 = vld [vmem:[#allocation11 + $0x18] sm:$0xff]
    %v307 = vlaneseq
    %v308 = vshrl.u32 %v307, 7
    %v309 = vsub.s32 2, %v308
    %v310 = vrot.slane %v113, %v309
    %v312 = vsel %vm124, %v301, 0
    %v315 = vsel %vm124, %v302, 0
    %317 = vmatprep.subr.mxu0 0.0
    %318 = vmatpush1.msra.mxu0 %v303
    %319 = vmatprep.subr.mxu0 0.0
    %320 = vmatpush1.msra.mxu0 %v304
    %321 = vmatprep.subr.mxu0 0.0
    %322 = vmatpush1.msra.mxu0 %v305
    %323 = vmatprep.subr.mxu0 0.0
    %324 = vmatpush1.msra.mxu0 %v306
    %325 = vmatprep.subr.mxu0 0.0
    %326 = vmatpush1.msra.mxu0 0.0
    %327 = vmatprep.subr.mxu0 0.0
    %328 = vmatpush1.msra.mxu0 0.0
    %329 = vmatprep.subr.mxu0 0.0
    %330 = vmatpush1.msra.mxu0 0.0
    %331 = vmatprep.subr.mxu0 0.0
    %332 = vmatpush1.msra.mxu0 0.0
    %333 = vmatprep.subr.mxu0 0.0
    %334 = vmatpush1.msra.mxu0 0.0
    %335 = vmatprep.subr.mxu0 0.0
    %336 = vmatpush1.msra.mxu0 0.0
    %337 = vmatprep.subr.mxu0 0.0
    %338 = vmatpush1.msra.mxu0 0.0
    %339 = vmatprep.subr.mxu0 0.0
    %340 = vmatpush1.msra.mxu0 0.0
    %341 = vmatprep.subr.mxu0 0.0
    %342 = vmatpush1.msra.mxu0 0.0
    %343 = vmatprep.subr.mxu0 0.0
    %344 = vmatpush1.msra.mxu0 0.0
    %345 = vmatprep.subr.mxu0 0.0
    %346 = vmatpush1.msra.mxu0 0.0
    %347 = vmatprep.subr.mxu0 0.0
    %348 = vmatpush1.msra.mxu0 0.0
    %349 = vmatprep.subr.mxu0 0.0
    %350 = vmatpush1.msra.mxu0 0.0
    %351 = vmatprep.subr.mxu0 0.0
    %352 = vmatpush1.msra.mxu0 0.0
    %353 = vmatprep.subr.mxu0 0.0
    %354 = vmatpush1.msra.mxu0 0.0
    %355 = vmatprep.subr.mxu0 0.0
    %356 = vmatpush1.msra.mxu0 0.0
    %357 = vmatprep.subr.mxu0 0.0
    %358 = vmatpush1.msra.mxu0 0.0
    %359 = vmatprep.subr.mxu0 0.0
    %360 = vmatpush1.msra.mxu0 0.0
    %361 = vmatprep.subr.mxu0 0.0
    %362 = vmatpush1.msra.mxu0 0.0
    %363 = vmatprep.subr.mxu0 0.0
    %364 = vmatpush1.msra.mxu0 0.0
    %365 = vmatprep.subr.mxu0 0.0
    %366 = vmatpush1.msra.mxu0 0.0
    %367 = vmatprep.subr.mxu0 0.0
    %368 = vmatpush1.msra.mxu0 0.0
    %369 = vmatprep.subr.mxu0 0.0
    %370 = vmatpush1.msra.mxu0 0.0
    %371 = vmatprep.subr.mxu0 0.0
    %372 = vmatpush1.msra.mxu0 0.0
    %373 = vmatprep.subr.mxu0 0.0
    %374 = vmatpush1.msra.mxu0 0.0
    %375 = vmatprep.subr.mxu0 0.0
    %376 = vmatpush1.msra.mxu0 0.0
    %377 = vmatprep.subr.mxu0 0.0
    %378 = vmatpush1.msra.mxu0 0.0
    %379 = vmatprep.subr.mxu0 0.0
    %380 = vmatpush1.msra.mxu0 0.0
    %381 = vmatprep.mubr.f32.mxu0 0.0
    %382 = vmatmul.mubr.f32.gmra.mrb[0].mxu0 %v312
    %v383 = vpop.f32.mrb[0].mxu0
    %v384 = vadd.f32 %v310, %v383
    %v385 = vpop.f32.mrb[0].mxu0
    %386 = vmatprep.mubr.f32.mxu0 0.0
    %387 = vmatmul.mubr.f32.gmra.mrb[0].mxu0 %v315
    %v388 = vpop.f32.mrb[0].mxu0
    %v389 = vadd.f32 %v310, %v388
    %v390 = vpop.f32.mrb[0].mxu0
    %391 = vdwg.mxu0
    %392 = vst.msk [vmem:[#allocation16] sm:$0xff] %vm124, %v384
    %393 = vst.msk [vmem:[#allocation16 + $0x8] sm:$0xff] %vm124, %v389
    // Predicated region
    $region54: #{tpu_custom_call.1} parent=1 // pred_check
      _
    $region55: #{tpu_custom_call.1} parent=1 // pred_check_branch
      %395 = sbr.rel (0) target = $region57
    $region56: #{tpu_custom_call.1} parent=1 // pred_region
      %s397 = ssub.s32 256, 256
      %398 = vsyncadd [#allocation4], %s397
      %s399 = sshll.u32 [#allocation13], 4
      %s400 = int_to_ptr.vmem [resolvable:$true] %s399
      %405 = dma.vmem_to_hbm [thread:$0]  %s400, 256, %s7, [#allocation4], 128, 128, 8
    $region57: #{tpu_custom_call.1} parent=1 // pred_fallthru
      _
    // Predicated region
    $region58: #{tpu_custom_call.1} parent=1 // pred_check
      _
    $region59: #{tpu_custom_call.1} parent=1 // pred_check_branch
      %407 = sbr.rel (0) target = $region61
    $region60: #{tpu_custom_call.1} parent=1 // pred_region
      %s409 = ssub.s32 256, 256
      %410 = vsyncadd [#allocation15], %s409
      %s411 = sshll.u32 [#allocation14], 4
      %s412 = int_to_ptr.vmem [resolvable:$true] %s411
      %417 = dma.vmem_to_hbm [thread:$0]  %s412, 256, %s8, [#allocation15], 128, 128, 8
    $region61: #{tpu_custom_call.1} parent=1 // pred_fallthru
      _
    // Predicated region
    $region62: #{tpu_custom_call.1} parent=1 // pred_check
      _
    $region63: #{tpu_custom_call.1} parent=1 // pred_check_branch
      %419 = sbr.rel (0) target = $region65
    $region64: #{tpu_custom_call.1} parent=1 // pred_region
      %s421 = ssub.s32 256, 256
      %422 = vsyncadd [#allocation15], %s421
      %s423 = sshll.u32 [#allocation16], 4
      %s424 = int_to_ptr.vmem [resolvable:$true] %s423
      %429 = dma.vmem_to_hbm [thread:$0]  %s424, 256, %s9, [#allocation15], 128, 128, 8
    $region65: #{tpu_custom_call.1} parent=1 // pred_fallthru
      _
    // Predicated region
    $region66: #{tpu_custom_call.1} parent=1 // pred_check
      _
    $region67: #{tpu_custom_call.1} parent=1 // pred_check_branch
      %431 = sbr.rel (0) target = $region69
    $region68: #{tpu_custom_call.1} parent=1 // pred_region
      %432 = dma.done [#allocation4], 256
    $region69: #{tpu_custom_call.1} parent=1 // pred_fallthru
      _
    // Predicated region
    $region70: #{tpu_custom_call.1} parent=1 // pred_check
      _
    $region71: #{tpu_custom_call.1} parent=1 // pred_check_branch
      %434 = sbr.rel (0) target = $region73
    $region72: #{tpu_custom_call.1} parent=1 // pred_region
      %435 = dma.done [#allocation15], 256
    $region73: #{tpu_custom_call.1} parent=1 // pred_fallthru
      _
    // Predicated region
    $region74: #{tpu_custom_call.1} parent=1 // pred_check
      _
    $region75: #{tpu_custom_call.1} parent=1 // pred_check_branch
      %437 = sbr.rel (0) target = $region77
    $region76: #{tpu_custom_call.1} parent=1 // pred_region
      %438 = dma.done [#allocation15], 256
    $region77: #{tpu_custom_call.1} parent=1 // pred_fallthru
      _
    %439 = vsyncpa [#allocation3], 1
    %440 = vsyncpa [#allocation6], 1
    %441 = vsyncpa [#allocation9], 1
    %442 = vsyncpa [#allocation12], 1
    %443 = vsyncpa [#allocation4], 1
    %444 = vsyncpa [#allocation15], 1

</llo_original>
